<compile_context>
chip_gen: v5e
topology: v5e:2x2
jax: 0.10.0
libtpu: 0.0.40
codegen_flags: <defaults>
</compile_context>

<pallas_src>
import functools
import math

import jax
import jax.numpy as jnp
from jax.experimental import pallas as pl
from jax.experimental.pallas import tpu as pltpu


def _kldiv_labelsmooth_kernel(pred_ref, tgt_ref, out_ref, *,
                              confidence, smooth_val, pad_idx,
                              n_rows, tn, tk, row_tail):
    """Writes one (8, 128) block of partial sums of  dist * predicts."""
    k_off = pl.program_id(1) * tk
    pred = pred_ref[...].astype(jnp.float32)          # (tn, tk)
    tgt = tgt_ref[...]                                 # (tn, 1) int32

    # Per-row gate: live rows are target != pad_idx (and inside the array for
    # the (possibly) partial last row-block).  Hoisted out of the element loop.
    live = tgt != pad_idx
    if row_tail:
        row = jax.lax.broadcasted_iota(jnp.int32, (tn, 1), 0) + pl.program_id(0) * tn
        live = live & (row < n_rows)
        # Guard: out-of-bounds tail rows may contain garbage (possibly NaN).
        pred = jnp.where(live, pred, jnp.float32(0.0))
    conf_row = jnp.where(live, jnp.float32(confidence), jnp.float32(0.0))
    smooth_row = jnp.where(live, jnp.float32(smooth_val), jnp.float32(0.0))

    # Smoothed-distribution weights built on the fly (no scatter, no logs):
    #   w = conf on the target column, 0 on the pad column, smooth elsewhere,
    # with the row gate already folded into conf_row / smooth_row.
    col = jax.lax.broadcasted_iota(jnp.int32, (tn, tk), 1)      # local columns
    w = jnp.where(col == (tgt - k_off), conf_row, smooth_row)
    w = jnp.where(col == (pad_idx - k_off), jnp.float32(0.0), w)

    elem = w * pred                                              # dist * predicts

    if tn % 8 == 0 and tk % 128 == 0:
        # Tile-aligned reduction: sum of all native (8,128) tiles -> pure vreg adds.
        part = elem.reshape(tn // 8, 8, tk // 128, 128).sum(axis=(0, 2))
    else:
        # Fallback (unaligned vocab / tiny row count): scalar sum into lane (0,0).
        s = jnp.sum(elem)
        r8 = jax.lax.broadcasted_iota(jnp.int32, (8, 128), 0)
        c128 = jax.lax.broadcasted_iota(jnp.int32, (8, 128), 1)
        part = jnp.where((r8 == 0) & (c128 == 0), s, jnp.float32(0.0))

    out_ref[0, 0, :, :] = part


def _choose_tiles(n_rows, n_vocab, target_elems=512 * 1024, max_tk=2048):
    """Pick (tn, tk): ~2 MiB f32-equivalent blocks, tk divides V, megacore-friendly."""
    # Column tile: largest multiple of 128 that divides V (<= max_tk); otherwise
    # the whole vocab as a single full-dim block (no column padding / masking).
    if n_vocab % 128 == 0:
        tk = 128
        for cand in range(min(max_tk, n_vocab), 0, -128):
            if n_vocab % cand == 0:
                tk = cand
                break
    else:
        tk = n_vocab
    n_k = pl.cdiv(n_vocab, tk)

    if n_rows < 8:
        return n_rows, tk                              # full-dim row block

    tn = max(8, (target_elems // tk) // 8 * 8)
    tn = min(tn, max(8, (n_rows // 8) * 8))
    # Keep >= 4 grid points when there is enough work (v7x megacore sharding).
    if n_k * pl.cdiv(n_rows, tn) < 4 and n_rows >= 32:
        tn = max(8, min(tn, (n_rows // 4) // 8 * 8))
    return tn, tk


def kldiv_loss(predicts, target, *, n_vocab, pad_idx, label_smoothing, norm=1.0):
    """predicts: (..., V) log-probs (f32 or bf16); target: (...,) int.

    Returns KLDivLoss(size_average=False) with label smoothing, divided by norm.
    """
    V = predicts.shape[-1]
    assert V == n_vocab
    assert n_vocab > 2

    pred2d = predicts.reshape(-1, V)
    if not jnp.issubdtype(pred2d.dtype, jnp.floating):
        pred2d = pred2d.astype(jnp.float32)            # bf16/f32 pass straight through
    N = pred2d.shape[0]
    tgt2d = target.reshape(-1, 1).astype(jnp.int32)

    tn, tk = _choose_tiles(N, V)
    n_i = pl.cdiv(N, tn)
    n_k = pl.cdiv(V, tk)
    row_tail = (N % tn) != 0

    confidence = 1.0 - label_smoothing
    smooth_val = label_smoothing / (n_vocab - 2)
    log_conf = math.log(confidence) if confidence > 0.0 else 0.0
    log_smooth = math.log(smooth_val) if smooth_val > 0.0 else 0.0
    # sum(dist * log(dist)) for one live row (pointwise 0 where dist == 0).
    row_const = confidence * log_conf + (n_vocab - 2) * smooth_val * log_smooth

    kernel = functools.partial(
        _kldiv_labelsmooth_kernel,
        confidence=confidence, smooth_val=smooth_val, pad_idx=pad_idx,
        n_rows=N, tn=tn, tk=tk, row_tail=row_tail)

    partials = pl.pallas_call(
        kernel,
        out_shape=jax.ShapeDtypeStruct((n_i, n_k, 8, 128), jnp.float32),
        grid_spec=pltpu.PrefetchScalarGridSpec(
            num_scalar_prefetch=0,
            grid=(n_i, n_k),
            in_specs=[
                pl.BlockSpec((tn, tk), lambda i, k: (i, k)),   # predicts tile
                pl.BlockSpec((tn, 1), lambda i, k: (i, 0)),    # target tile
            ],
            out_specs=pl.BlockSpec((1, 1, 8, 128), lambda i, k: (i, k, 0, 0)),
        ),
        compiler_params=pltpu.CompilerParams(
            dimension_semantics=("parallel", "parallel"),
            vmem_limit_bytes=48 * 1024 * 1024),
    )(pred2d, tgt2d)

    n_live = jnp.sum((tgt2d[:, 0] != pad_idx).astype(jnp.float32))
    loss = n_live * jnp.float32(row_const) - jnp.sum(partials)
    return loss / jnp.asarray(norm, jnp.float32)


def _reference(predicts, target, *, n_vocab, pad_idx, label_smoothing, norm=1.0):
    """Pure-JAX reference of the PyTorch forward for sanity checking."""
    V = predicts.shape[-1]
    pred2d = predicts.reshape(-1, V).astype(jnp.float32)
    tgt = target.reshape(-1).astype(jnp.int32)
    N = pred2d.shape[0]
    confidence = 1.0 - label_smoothing
    smooth_val = label_smoothing / (n_vocab - 2)
    dist = jnp.full((N, V), smooth_val, jnp.float32)
    dist = dist.at[jnp.arange(N), tgt].set(confidence)
    dist = dist.at[:, pad_idx].set(0.0)
    dist = jnp.where((tgt == pad_idx)[:, None], 0.0, dist)
    elem = jnp.where(dist > 0,
                     dist * (jnp.log(jnp.where(dist > 0, dist, 1.0)) - pred2d),
                     0.0)
    return jnp.sum(elem) / norm


if __name__ == "__main__":
    # Config (deterministic, in-script): n_vocab=128, pad_idx=0, label_smoothing=0.1
    n_vocab = 128
    pad_idx = 0
    label_smoothing = 0.1

    batch, seq = 2, 8
    key = jax.random.PRNGKey(0)
    k_logits, k_tgt = jax.random.split(key)

    logits = jax.random.normal(k_logits, (batch, seq, n_vocab), dtype=jnp.float32)
    predicts = jax.nn.log_softmax(logits, axis=-1)           # KLDivLoss expects log-probs
    target = jax.random.randint(k_tgt, (batch, seq), 0, n_vocab, dtype=jnp.int32)
    target = target.at[0, 0].set(pad_idx)                    # include a padded position

    norm = 2.0

    # f32 path
    loss = kldiv_loss(predicts, target, n_vocab=n_vocab, pad_idx=pad_idx,
                      label_smoothing=label_smoothing, norm=norm)
    loss = jax.block_until_ready(loss)
    ref = _reference(predicts, target, n_vocab=n_vocab, pad_idx=pad_idx,
                     label_smoothing=label_smoothing, norm=norm)
    assert jnp.allclose(loss, ref, rtol=1e-4, atol=1e-4), (loss, ref)

    # bf16 path (predicts streamed as bf16, f32 accumulation in-kernel)
    predicts_bf16 = predicts.astype(jnp.bfloat16)
    loss_bf = kldiv_loss(predicts_bf16, target, n_vocab=n_vocab, pad_idx=pad_idx,
                         label_smoothing=label_smoothing, norm=norm)
    loss_bf = jax.block_until_ready(loss_bf)
    ref_bf = _reference(predicts_bf16, target, n_vocab=n_vocab, pad_idx=pad_idx,
                        label_smoothing=label_smoothing, norm=norm)
    assert jnp.allclose(loss_bf, ref_bf, rtol=1e-3, atol=1e-3), (loss_bf, ref_bf)

    print("KERNEL_OK")
</pallas_src>

<mosaic_0001>
module attributes {stable_mosaic.version = 11 : i64} {
  func.func @_kldiv_labelsmooth_kernel(%arg0: i32, %arg1: i32, %arg2: memref<16x128xf32, #tpu.memory_space<vmem>>, %arg3: memref<16x1xi32, #tpu.memory_space<vmem>>, %arg4: memref<1x1x8x128xf32, #tpu.memory_space<vmem>>) attributes {dimension_semantics = [#tpu.dimension_semantics<parallel>, #tpu.dimension_semantics<parallel>], iteration_bounds = array<i64: 1, 1>, scalar_prefetch = 0 : i64, scratch_operands = 0 : i64, tpu.core_type = #tpu.core_type<tc>, window_params = [{transform_indices = @transform_0, window_bounds = array<i64: 16, 128>}, {transform_indices = @transform_1, window_bounds = array<i64: 16, 1>}, {transform_indices = @transform_2, window_bounds = array<i64: 1, 1, 8, 128>}]} {
    %c128_i32 = arith.constant 128 : i32
    %0 = arith.muli %arg1, %c128_i32 : i32
    %c0 = arith.constant 0 : index
    %c0_0 = arith.constant 0 : index
    %1 = vector.load %arg2[%c0, %c0_0] : memref<16x128xf32, #tpu.memory_space<vmem>>, vector<16x128xf32>
    %c0_1 = arith.constant 0 : index
    %c0_2 = arith.constant 0 : index
    %2 = vector.load %arg3[%c0_1, %c0_2] : memref<16x1xi32, #tpu.memory_space<vmem>>, vector<16x1xi32>
    %c0_i32 = arith.constant 0 : i32
    %3 = vector.broadcast %c0_i32 : i32 to vector<16x1xi32>
    %4 = arith.cmpi ne, %2, %3 : vector<16x1xi32>
    %cst = arith.constant 0.899999976 : f32
    %cst_3 = arith.constant 0.000000e+00 : f32
    %5 = vector.broadcast %cst : f32 to vector<16x1xf32>
    %6 = vector.broadcast %cst_3 : f32 to vector<16x1xf32>
    %7 = arith.select %4, %5, %6 : vector<16x1xi1>, vector<16x1xf32>
    %cst_4 = arith.constant 7.93650805E-4 : f32
    %cst_5 = arith.constant 0.000000e+00 : f32
    %8 = vector.broadcast %cst_4 : f32 to vector<16x1xf32>
    %9 = vector.broadcast %cst_5 : f32 to vector<16x1xf32>
    %10 = arith.select %4, %8, %9 : vector<16x1xi1>, vector<16x1xf32>
    %11 = tpu.iota {dimensions = array<i32: 1>} : vector<16x128xi32>
    %12 = vector.broadcast %0 : i32 to vector<16x1xi32>
    %13 = arith.subi %2, %12 : vector<16x1xi32>
    %14 = vector.broadcast %13 : vector<16x1xi32> to vector<16x128xi32>
    %15 = arith.cmpi eq, %11, %14 : vector<16x128xi32>
    %16 = vector.shape_cast %7 : vector<16x1xf32> to vector<16x1xf32>
    %17 = vector.broadcast %16 : vector<16x1xf32> to vector<16x128xf32>
    %18 = vector.shape_cast %10 : vector<16x1xf32> to vector<16x1xf32>
    %19 = vector.broadcast %18 : vector<16x1xf32> to vector<16x128xf32>
    %20 = arith.select %15, %17, %19 : vector<16x128xi1>, vector<16x128xf32>
    %c0_i32_6 = arith.constant 0 : i32
    %21 = arith.subi %c0_i32_6, %0 : i32
    %22 = vector.broadcast %21 : i32 to vector<16x128xi32>
    %23 = arith.cmpi eq, %11, %22 : vector<16x128xi32>
    %cst_7 = arith.constant 0.000000e+00 : f32
    %24 = vector.broadcast %cst_7 : f32 to vector<16x128xf32>
    %25 = arith.select %23, %24, %20 : vector<16x128xi1>, vector<16x128xf32>
    %26 = arith.mulf %25, %1 : vector<16x128xf32>
    %27 = vector.shape_cast %26 : vector<16x128xf32> to vector<2x8x1x128xf32>
    %cst_8 = arith.constant dense<0.000000e+00> : vector<8x128xf32>
    %28 = vector.multi_reduction <add>, %27, %cst_8 [0, 2] : vector<2x8x1x128xf32> to vector<8x128xf32>
    %c0_9 = arith.constant 0 : index
    %c0_10 = arith.constant 0 : index
    %c0_11 = arith.constant 0 : index
    %c0_12 = arith.constant 0 : index
    %29 = vector.load %arg4[%c0_9, %c0_10, %c0_11, %c0_12] : memref<1x1x8x128xf32, #tpu.memory_space<vmem>>, vector<1x1x8x128xf32>
    %30 = vector.shape_cast %29 : vector<1x1x8x128xf32> to vector<8x128xf32>
    %31 = vector.shape_cast %28 : vector<8x128xf32> to vector<1x1x8x128xf32>
    tpu.vector_store %arg4[%c0_9, %c0_10, %c0_11, %c0_12], %31 {strides = array<i32>} : memref<1x1x8x128xf32, #tpu.memory_space<vmem>>, vector<1x1x8x128xf32>,
    return
  }
  func.func @transform_0(%arg0: i32, %arg1: i32) -> (i32, i32) {
    %c0_i32 = arith.constant 0 : i32
    return %arg0, %arg1 : i32, i32
  }
  func.func @transform_1(%arg0: i32, %arg1: i32) -> (i32, i32) {
    %c0_i32 = arith.constant 0 : i32
    %c0_i32_0 = arith.constant 0 : i32
    return %arg0, %c0_i32 : i32, i32
  }
  func.func @transform_2(%arg0: i32, %arg1: i32) -> (i32, i32, i32, i32) {
    %c0_i32 = arith.constant 0 : i32
    %c0_i32_0 = arith.constant 0 : i32
    %c0_i32_1 = arith.constant 0 : i32
    return %arg0, %arg1, %c0_i32, %c0_i32_0 : i32, i32, i32, i32
  }
}

</mosaic_0001>

<llo_original>
// kernel: tpu_custom_call.1
$region0: #{tpu_custom_call.1}
  #allocation0 [shape = 'u32[]', space=smem, size = 0x4, offset = 0x4, fixed_abs, tag = 'smem constant byte address 0x4 - core index']
  #allocation1 [shape = 'u32[72,128]{1,0:T(1,128)}', space=vmem, size = 0x9000, scoped, tag = 'internal scratch']
  %s0 = inlined_call_operand.vmem [shape: f32[16,128], index: 0, kind: input, shape index: {}]
  %s1 = inlined_call_operand.vmem [shape: s32[16,1], index: 1, kind: input, shape index: {}]
  %s2 = inlined_call_operand.hbm [shape: f32[1,1,8,128], index: 2, kind: output, shape index: {}]
  %s3 = sld [smem:[#allocation0]]
  $region18: #{tpu_custom_call.1} parent=0
    _
  %s5 = ssub.s32 1, %s3
  %s6 = scalar_select 0, %s5, %s3
  $region1: #{tpu_custom_call.1} parent=0
    #allocation2 [shape = 'u8[4096]{0}', space=vmem, size = 0x1000, scoped, tag = 'output window, operand 0, single buffered']
    #allocation3 [shape = 's32[1]{0}', space=sflag, size = 0x4, scoped, tag = 'scoped memory for tpu_custom_call.1']
    %7 = vsyncpa [#allocation3], 0
    // Predicated region
    $region2: #{tpu_custom_call.1} parent=1 // pred_check
      _
    $region3: #{tpu_custom_call.1} parent=1 // pred_check_branch
      %9 = sbr.rel (0) target = $region5
    $region4: #{tpu_custom_call.1} parent=1 // pred_region
      _
    $region5: #{tpu_custom_call.1} parent=1 // pred_fallthru
      _
    // Predicated region
    $region6: #{tpu_custom_call.1} parent=1 // pred_check
      _
    $region7: #{tpu_custom_call.1} parent=1 // pred_check_branch
      %11 = sbr.rel (0) target = $region9
    $region8: #{tpu_custom_call.1} parent=1 // pred_region
      _
    $region9: #{tpu_custom_call.1} parent=1 // pred_fallthru
      _
    %s12 = smul.u32 0, 128
    %v13 = vld [vmem:[%s0] sm:$0xff]
    %v14 = vld [vmem:[%s0 + $0x8] sm:$0xff]
    %v15 = vld [vmem:[%s1] sm:$0xff]
    %v16 = vld [vmem:[%s1 + $0x8] sm:$0xff]
    %vm17 = vcmp.ne.s32.totalorder %v15, 0
    %vm18 = vcmp.ne.s32.totalorder %v16, 0
    %v19 = vsel %vm17, 0.9, 0.0
    %v20 = vsel %vm18, 0.9, 0.0
    %v21 = vsel %vm17, 0.0007936508, 0.0
    %v22 = vsel %vm18, 0.0007936508, 0.0
    %v23 = vlaneseq
    %v24 = vand.u32 %v23, 127
    %v25 = vstv %s12
    %v26 = vsub.s32 %v15, %v25
    %v27 = vsub.s32 %v16, %v25
    %28 = vset.pattern.permute.xlu0 0
    %29 = vperm.xlu0 %28, %v26
    %v30 = vpop.permute.xlu0 %29
    %31 = vset.pattern.permute.xlu0 0
    %32 = vperm.xlu0 %31, %v27
    %v33 = vpop.permute.xlu0 %32
    %vm34 = vcmp.eq.s32.totalorder %v24, %v30
    %vm35 = vcmp.eq.s32.totalorder %v24, %v33
    %37 = vset.pattern.permute.xlu0 0
    %38 = vperm.xlu0 %37, %v19
    %v39 = vpop.permute.xlu0 %38
    %42 = vset.pattern.permute.xlu0 0
    %43 = vperm.xlu0 %42, %v20
    %v44 = vpop.permute.xlu0 %43
    %47 = vset.pattern.permute.xlu0 0
    %48 = vperm.xlu0 %47, %v21
    %v49 = vpop.permute.xlu0 %48
    %52 = vset.pattern.permute.xlu0 0
    %53 = vperm.xlu0 %52, %v22
    %v54 = vpop.permute.xlu0 %53
    %v56 = vsel %vm34, %v39, %v49
    %v57 = vsel %vm35, %v44, %v54
    %s58 = ssub.s32 0, %s12
    %v59 = vstv %s58
    %vm60 = vcmp.eq.s32.totalorder %v24, %v59
    %v61 = vsel %vm60, 0.0, %v56
    %v62 = vsel %vm60, 0.0, %v57
    %v63 = vmul.f32 %v61, %v13
    %v64 = vmul.f32 %v62, %v14
    %v67 = vrot.slane %v63, 1
    %v68 = vrot.slane %v63, 2
    %v69 = vrot.slane %v63, 3
    %v70 = vrot.slane %v63, 4
    %v71 = vrot.slane %v63, 5
    %v72 = vrot.slane %v63, 6
    %v73 = vrot.slane %v63, 7
    %v74 = vrot.slane %v64, 1
    %v75 = vrot.slane %v64, 2
    %v76 = vrot.slane %v64, 3
    %v77 = vrot.slane %v64, 4
    %v78 = vrot.slane %v64, 5
    %v79 = vrot.slane %v64, 6
    %v80 = vrot.slane %v64, 7
    %vm95 = vcmask 1040384
    %v96 = vsel %vm95, %v63, 0.0
    %v97 = vsel %vm95, %v64, 0.0
    %v98 = vadd.f32 %v96, %v97
    %v99 = vrot.slane %v98, 4
    %v100 = vadd.f32 %v98, %v99
    %v101 = vrot.slane %v100, 2
    %v102 = vadd.f32 %v100, %v101
    %v103 = vrot.slane %v102, 1
    %v104 = vadd.f32 %v102, %v103
    %v105 = vsel %vm95, %v67, 0.0
    %v106 = vsel %vm95, %v74, 0.0
    %v107 = vadd.f32 %v105, %v106
    %v108 = vrot.slane %v107, 4
    %v109 = vadd.f32 %v107, %v108
    %v110 = vrot.slane %v109, 2
    %v111 = vadd.f32 %v109, %v110
    %v112 = vrot.slane %v111, 1
    %v113 = vadd.f32 %v111, %v112
    %v114 = vsel %vm95, %v68, 0.0
    %v115 = vsel %vm95, %v75, 0.0
    %v116 = vadd.f32 %v114, %v115
    %v117 = vrot.slane %v116, 4
    %v118 = vadd.f32 %v116, %v117
    %v119 = vrot.slane %v118, 2
    %v120 = vadd.f32 %v118, %v119
    %v121 = vrot.slane %v120, 1
    %v122 = vadd.f32 %v120, %v121
    %v123 = vsel %vm95, %v69, 0.0
    %v124 = vsel %vm95, %v76, 0.0
    %v125 = vadd.f32 %v123, %v124
    %v126 = vrot.slane %v125, 4
    %v127 = vadd.f32 %v125, %v126
    %v128 = vrot.slane %v127, 2
    %v129 = vadd.f32 %v127, %v128
    %v130 = vrot.slane %v129, 1
    %v131 = vadd.f32 %v129, %v130
    %v132 = vsel %vm95, %v70, 0.0
    %v133 = vsel %vm95, %v77, 0.0
    %v134 = vadd.f32 %v132, %v133
    %v135 = vrot.slane %v134, 4
    %v136 = vadd.f32 %v134, %v135
    %v137 = vrot.slane %v136, 2
    %v138 = vadd.f32 %v136, %v137
    %v139 = vrot.slane %v138, 1
    %v140 = vadd.f32 %v138, %v139
    %v141 = vsel %vm95, %v71, 0.0
    %v142 = vsel %vm95, %v78, 0.0
    %v143 = vadd.f32 %v141, %v142
    %v144 = vrot.slane %v143, 4
    %v145 = vadd.f32 %v143, %v144
    %v146 = vrot.slane %v145, 2
    %v147 = vadd.f32 %v145, %v146
    %v148 = vrot.slane %v147, 1
    %v149 = vadd.f32 %v147, %v148
    %v150 = vsel %vm95, %v72, 0.0
    %v151 = vsel %vm95, %v79, 0.0
    %v152 = vadd.f32 %v150, %v151
    %v153 = vrot.slane %v152, 4
    %v154 = vadd.f32 %v152, %v153
    %v155 = vrot.slane %v154, 2
    %v156 = vadd.f32 %v154, %v155
    %v157 = vrot.slane %v156, 1
    %v158 = vadd.f32 %v156, %v157
    %v159 = vsel %vm95, %v73, 0.0
    %v160 = vsel %vm95, %v80, 0.0
    %v161 = vadd.f32 %v159, %v160
    %v162 = vrot.slane %v161, 4
    %v163 = vadd.f32 %v161, %v162
    %v164 = vrot.slane %v163, 2
    %v165 = vadd.f32 %v163, %v164
    %v166 = vrot.slane %v165, 1
    %v167 = vadd.f32 %v165, %v166
    %vm176 = vcmask 1041409
    %v177 = vsel %vm176, %v113, %v104
    %vm178 = vcmask 1042434
    %v179 = vsel %vm178, %v122, %v177
    %vm180 = vcmask 1043459
    %v181 = vsel %vm180, %v131, %v179
    %vm182 = vcmask 1044484
    %v183 = vsel %vm182, %v140, %v181
    %vm184 = vcmask 1045509
    %v185 = vsel %vm184, %v149, %v183
    %vm186 = vcmask 1046534
    %v187 = vsel %vm186, %v158, %v185
    %vm188 = vcmask 1047559
    %v189 = vsel %vm188, %v167, %v187
    %191 = vst [vmem:[#allocation2] sm:$0xff] %v189
    // Predicated region
    $region10: #{tpu_custom_call.1} parent=1 // pred_check
      _
    $region11: #{tpu_custom_call.1} parent=1 // pred_check_branch
      %193 = sbr.rel (0) target = $region13
    $region12: #{tpu_custom_call.1} parent=1 // pred_region
      %195 = vsyncadd [#allocation3], 0
      %s197 = sshll.u32 [#allocation2], 4
      %s198 = int_to_ptr.vmem [resolvable:$true] %s197
      %s199 = sshll.u32 %s2, 4
      %s200 = int_to_ptr.hbm [resolvable:$true] %s199
      %202 = dma.vmem_to_hbm [thread:$0]  %s198, 128, %s200, [#allocation3]
    $region13: #{tpu_custom_call.1} parent=1 // pred_fallthru
      _
    // Predicated region
    $region14: #{tpu_custom_call.1} parent=1 // pred_check
      _
    $region15: #{tpu_custom_call.1} parent=1 // pred_check_branch
      %204 = sbr.rel (0) target = $region17
    $region16: #{tpu_custom_call.1} parent=1 // pred_region
      %206 = dma.done [#allocation3], 128
    $region17: #{tpu_custom_call.1} parent=1 // pred_fallthru
      _
    %207 = vsyncpa [#allocation3], 1

</llo_original>
